<compile_context>
chip_gen: v7x
topology: tpu7x:2x2x1
jax: 0.10.0
libtpu: 0.0.40
codegen_flags: <defaults>
</compile_context>

<pallas_src>
import functools
import math

import jax
import jax.numpy as jnp
from jax.experimental import pallas as pl
from jax.experimental.pallas import tpu as pltpu

# ----------------------------------------------------------------------------
# Small synthetic "ProtBERT" config (real model: H=1024, 30 layers, 16 heads).
# ----------------------------------------------------------------------------
BATCH = 2
SEQ = 8
HIDDEN = 32
NUM_HEADS = 4
HEAD_DIM = HIDDEN // NUM_HEADS
INTERMEDIATE = 4 * HIDDEN
NUM_LAYERS = 2
VOCAB = 30
NUM_LABELS = 3
LABEL_PAD = 128          # lane-dense padded width for the final projection
LN_EPS = 1e-12           # BERT layer_norm_eps
ACT_DTYPE = jnp.bfloat16  # activation / weight storage dtype (MXU inputs)


def _pick_tile(dim, preferred):
    """Largest divisor of `dim` that is <= `preferred` (never the full dim
    unless dim <= preferred). Avoids silent full-dimension blocks."""
    t = min(dim, preferred)
    while dim % t:
        t -= 1
    return t


@functools.lru_cache(maxsize=None)
def _vmem_limit_bytes():
    """Per-generation scoped-VMEM limit: 3/4 of physical, capped at 96 MiB.
    -> ~48 MiB on v7x (64 MiB VMEM), 96 MiB on v5e/v6e (128 MiB VMEM)."""
    phys = 64 * 1024 * 1024  # conservative default (v7x)
    try:
        info = pltpu.get_tpu_info()
        phys = int(getattr(info, "vmem_capacity_bytes", phys)) or phys
    except Exception:
        pass
    return min((phys * 3) // 4, 96 * 1024 * 1024)


# ----------------------------------------------------------------------------
# Pallas kernels
# ----------------------------------------------------------------------------
def _matmul_bias_kernel(x_ref, w_ref, b_ref, o_ref, acc_ref, *, activation):
    """Tiled X @ W + b with optional fused exact GELU.  K axis = grid axis 2."""
    @pl.when(pl.program_id(2) == 0)
    def _():
        acc_ref[...] = jnp.zeros_like(acc_ref)

    acc_ref[...] += jnp.dot(x_ref[...], w_ref[...],
                            preferred_element_type=jnp.float32)

    @pl.when(pl.program_id(2) == pl.num_programs(2) - 1)
    def _():
        y = acc_ref[...] + b_ref[...]
        if activation == "gelu":
            # exact (erf) GELU, as used by BERT's "gelu" activation
            y = 0.5 * y * (1.0 + jax.lax.erf(y * 0.7071067811865476))
        o_ref[...] = y.astype(o_ref.dtype)


def _matmul_res_ln_kernel(x_ref, w_ref, b_ref, r_ref, g_ref, beta_ref,
                          o_ref, acc_ref):
    """Tiled X @ W + b, then fused residual add + LayerNorm (full-N blocks)."""
    @pl.when(pl.program_id(1) == 0)
    def _():
        acc_ref[...] = jnp.zeros_like(acc_ref)

    acc_ref[...] += jnp.dot(x_ref[...], w_ref[...],
                            preferred_element_type=jnp.float32)

    @pl.when(pl.program_id(1) == pl.num_programs(1) - 1)
    def _():
        y = acc_ref[...] + b_ref[...] + r_ref[...].astype(jnp.float32)
        mu = jnp.mean(y, axis=-1, keepdims=True)
        var = jnp.mean((y - mu) ** 2, axis=-1, keepdims=True)
        o_ref[...] = ((y - mu) * jax.lax.rsqrt(var + LN_EPS) * g_ref[...]
                      + beta_ref[...]).astype(o_ref.dtype)


def _ln_kernel(x_ref, g_ref, b_ref, o_ref):
    """No-residual LayerNorm (embedding LN); stats in f32."""
    x = x_ref[...].astype(jnp.float32)
    mu = jnp.mean(x, axis=-1, keepdims=True)
    var = jnp.mean((x - mu) ** 2, axis=-1, keepdims=True)
    o_ref[...] = ((x - mu) * jax.lax.rsqrt(var + LN_EPS) * g_ref[...]
                  + b_ref[...]).astype(o_ref.dtype)


def _attention_kernel(qkv_ref, mask_ref, ctx_ref, prob_ref=None, *, head_dim):
    """One (batch, head) pair per grid step.

    qkv_ref : (1, 1, S, 3*dh) bf16, layout [q | k | v] per head; q is already
              pre-scaled by 1/sqrt(dh) (folded into w_qkv at init).
    mask_ref: (1, 1, S) f32 additive bias (resident across the head axis).
    ctx_ref : (1, 1, S, dh)
    prob_ref: (1, 1, S, S)   (optional; bf16 by default)
    """
    qkv = qkv_ref[0, 0]                       # (S, 3*dh)
    bias = mask_ref[0]                        # (1, S) -> broadcasts over rows

    q = qkv[:, :head_dim]
    k = qkv[:, head_dim:2 * head_dim]
    v = qkv[:, 2 * head_dim:]

    # scores: contract head_dim of q and k -> (S, S), f32 accumulation
    s = jax.lax.dot_general(q, k, (((1,), (1,)), ((), ())),
                            preferred_element_type=jnp.float32)
    s = s + bias
    m = jnp.max(s, axis=-1, keepdims=True)
    e = jnp.exp(s - m)
    p = e * pl.reciprocal(jnp.sum(e, axis=-1, keepdims=True), approx=True)

    ctx_ref[0, 0] = jnp.dot(p.astype(v.dtype), v,
                            preferred_element_type=jnp.float32
                            ).astype(ctx_ref.dtype)
    if prob_ref is not None:
        prob_ref[0, 0] = p.astype(prob_ref.dtype)
    # TODO(synk): for very long sequences (S >> 1024) tile the key axis
    # (flash-style online softmax) instead of a full (S, S) score block.


def _pool_head_kernel(h_ref, w_ref, b_ref, sm_ref, emb_ref, acc_ref, *,
                      inv_seq_len):
    """Accumulated mean-pool over seq tiles -> dropout(identity) ->
    padded final proj -> exact softmax.  Grid = (B, S // ts)."""
    s = pl.program_id(1)

    @pl.when(s == 0)
    def _():
        acc_ref[...] = jnp.zeros_like(acc_ref)

    # NOTE: unmasked mean, exactly torch.mean(last_hidden_state, dim=1)
    acc_ref[...] += jnp.sum(h_ref[0].astype(jnp.float32), axis=0, keepdims=True)

    @pl.when(s == pl.num_programs(1) - 1)
    def _():
        pooled = acc_ref[...] * inv_seq_len            # (1, H) f32
        emb_ref[...] = pooled
        # TODO(synk): nn.Dropout(0.2) treated as identity (inference).
        logits = (jnp.dot(pooled.astype(w_ref.dtype), w_ref[...],
                          preferred_element_type=jnp.float32)
                  + b_ref[...])                        # (1, LABEL_PAD)
        m = jnp.max(logits, axis=-1, keepdims=True)
        e = jnp.exp(logits - m)
        # exact divide here (negligible cost, better parity with reference)
        sm_ref[...] = e / jnp.sum(e, axis=-1, keepdims=True)


# ----------------------------------------------------------------------------
# Wrappers around pallas_call
# ----------------------------------------------------------------------------
def matmul_bias(x, w, b, activation=None, out_dtype=ACT_DTYPE,
                tm_pref=1024, tn_pref=512, tk_pref=512):
    M, K = x.shape
    N = w.shape[1]
    tm = _pick_tile(M, tm_pref)
    tn = _pick_tile(N, tn_pref)
    tk = _pick_tile(K, tk_pref)
    kernel = functools.partial(_matmul_bias_kernel, activation=activation)
    return pl.pallas_call(
        kernel,
        grid=(M // tm, N // tn, K // tk),
        in_specs=[
            pl.BlockSpec((tm, tk), lambda i, j, k: (i, k)),
            pl.BlockSpec((tk, tn), lambda i, j, k: (k, j)),
            pl.BlockSpec((1, tn), lambda i, j, k: (0, j)),
        ],
        out_specs=pl.BlockSpec((tm, tn), lambda i, j, k: (i, j)),
        out_shape=jax.ShapeDtypeStruct((M, N), out_dtype),
        scratch_shapes=[pltpu.VMEM((tm, tn), jnp.float32)],
        compiler_params=pltpu.CompilerParams(
            dimension_semantics=("parallel", "parallel", "arbitrary"),
            vmem_limit_bytes=_vmem_limit_bytes()),
    )(x, w, b)


def matmul_bias_residual_ln(x, w, b, residual, gamma, beta,
                            out_dtype=ACT_DTYPE, tm_pref=512, tk_pref=512):
    M, K = x.shape
    N = w.shape[1]          # N kept whole per block so LayerNorm can reduce it
    tm = _pick_tile(M, tm_pref)
    tk = _pick_tile(K, tk_pref)
    return pl.pallas_call(
        _matmul_res_ln_kernel,
        grid=(M // tm, K // tk),
        in_specs=[
            pl.BlockSpec((tm, tk), lambda i, k: (i, k)),
            pl.BlockSpec((tk, N), lambda i, k: (k, 0)),
            pl.BlockSpec((1, N), lambda i, k: (0, 0)),
            pl.BlockSpec((tm, N), lambda i, k: (i, 0)),
            pl.BlockSpec((1, N), lambda i, k: (0, 0)),
            pl.BlockSpec((1, N), lambda i, k: (0, 0)),
        ],
        out_specs=pl.BlockSpec((tm, N), lambda i, k: (i, 0)),
        out_shape=jax.ShapeDtypeStruct((M, N), out_dtype),
        scratch_shapes=[pltpu.VMEM((tm, N), jnp.float32)],
        compiler_params=pltpu.CompilerParams(
            dimension_semantics=("parallel", "arbitrary"),
            vmem_limit_bytes=_vmem_limit_bytes()),
    )(x, w, b, residual, gamma, beta)


def layernorm(x, gamma, beta, out_dtype=ACT_DTYPE, tm_pref=1024):
    M, H = x.shape
    tm = _pick_tile(M, tm_pref)
    return pl.pallas_call(
        _ln_kernel,
        grid=(M // tm,),
        in_specs=[
            pl.BlockSpec((tm, H), lambda i: (i, 0)),
            pl.BlockSpec((1, H), lambda i: (0, 0)),
            pl.BlockSpec((1, H), lambda i: (0, 0)),
        ],
        out_specs=pl.BlockSpec((tm, H), lambda i: (i, 0)),
        out_shape=jax.ShapeDtypeStruct((M, H), out_dtype),
        compiler_params=pltpu.CompilerParams(
            dimension_semantics=("parallel",),
            vmem_limit_bytes=_vmem_limit_bytes()),
    )(x, gamma, beta)


def multi_head_attention(qkv, mask_bias, return_probs,
                         probs_dtype=jnp.bfloat16):
    """qkv: (B, NUM_HEADS, S, 3*dh) bf16 (head-major, q pre-scaled);
    mask_bias: (B, 1, S) f32 additive bias."""
    B, nH, S, d3 = qkv.shape
    dh = d3 // 3
    kernel = functools.partial(_attention_kernel, head_dim=dh)
    in_specs = [
        pl.BlockSpec((1, 1, S, d3), lambda b, h: (b, h, 0, 0)),
        pl.BlockSpec((1, 1, S), lambda b, h: (b, 0, 0)),   # resident across h
    ]
    out_specs = [pl.BlockSpec((1, 1, S, dh), lambda b, h: (b, h, 0, 0))]
    out_shape = [jax.ShapeDtypeStruct((B, nH, S, dh), qkv.dtype)]
    if return_probs:
        out_specs.append(pl.BlockSpec((1, 1, S, S), lambda b, h: (b, h, 0, 0)))
        out_shape.append(jax.ShapeDtypeStruct((B, nH, S, S), probs_dtype))
    outs = pl.pallas_call(
        kernel,
        grid=(B, nH),
        in_specs=in_specs,
        out_specs=out_specs,
        out_shape=out_shape,
        compiler_params=pltpu.CompilerParams(
            dimension_semantics=("parallel", "parallel"),
            vmem_limit_bytes=_vmem_limit_bytes()),
    )(qkv, mask_bias)
    if return_probs:
        return outs[0], outs[1]
    return outs[0], None


def pool_and_project(last_hidden, w_pad, b_pad, ts_pref=256):
    B, S, H = last_hidden.shape
    ts = _pick_tile(S, ts_pref)
    kernel = functools.partial(_pool_head_kernel, inv_seq_len=1.0 / S)
    sm_pad, emb = pl.pallas_call(
        kernel,
        grid=(B, S // ts),
        in_specs=[
            pl.BlockSpec((1, ts, H), lambda b, s: (b, s, 0)),
            pl.BlockSpec((H, LABEL_PAD), lambda b, s: (0, 0)),
            pl.BlockSpec((1, LABEL_PAD), lambda b, s: (0, 0)),
        ],
        out_specs=[
            pl.BlockSpec((1, LABEL_PAD), lambda b, s: (b, 0)),
            pl.BlockSpec((1, H), lambda b, s: (b, 0)),
        ],
        out_shape=[
            jax.ShapeDtypeStruct((B, LABEL_PAD), jnp.float32),
            jax.ShapeDtypeStruct((B, H), jnp.float32),
        ],
        scratch_shapes=[pltpu.VMEM((1, H), jnp.float32)],
        compiler_params=pltpu.CompilerParams(
            dimension_semantics=("parallel", "arbitrary"),
            vmem_limit_bytes=_vmem_limit_bytes()),
    )(last_hidden, w_pad, b_pad)
    return sm_pad[:, :NUM_LABELS], emb


# ----------------------------------------------------------------------------
# Synthetic parameter construction (deterministic; no checkpoint load)
# ----------------------------------------------------------------------------
def init_params(key):
    keys = iter(jax.random.split(key, 64))

    def wf(shape, scale=0.02):
        return scale * jax.random.normal(next(keys), shape, dtype=jnp.float32)

    def w(shape, scale=0.02):
        return wf(shape, scale).astype(ACT_DTYPE)

    # final projection, zero-padded to a lane-dense 128-wide slab; padded bias
    # columns get -1e9 so the softmax over the padded slab equals the softmax
    # over the first NUM_LABELS columns.
    fw = wf((HIDDEN, NUM_LABELS))
    final_w_pad = (jnp.zeros((HIDDEN, LABEL_PAD), jnp.float32)
                   .at[:, :NUM_LABELS].set(fw).astype(ACT_DTYPE))
    final_b_pad = jnp.full((1, LABEL_PAD), -1e9, jnp.float32
                           ).at[:, :NUM_LABELS].set(0.0)

    params = {
        "word_emb": w((VOCAB, HIDDEN)),
        "pos_emb": w((SEQ, HIDDEN)),
        "type_emb": w((2, HIDDEN)),
        "emb_ln_g": jnp.ones((1, HIDDEN), jnp.float32),
        "emb_ln_b": jnp.zeros((1, HIDDEN), jnp.float32),
        "final_w_pad": final_w_pad,
        "final_b_pad": final_b_pad,
        "layers": [],
    }

    attn_scale = 1.0 / math.sqrt(HEAD_DIM)
    for _ in range(NUM_LAYERS):
        # Fused QKV projection in HEAD-MAJOR column order:
        #   columns = [h0: q(dh) k(dh) v(dh) | h1: q k v | ...]
        # and 1/sqrt(dh) folded into the Q columns (parameter-prep transform;
        # for a real checkpoint this is the same zero-cost permute + scale).
        wq = wf((HIDDEN, HIDDEN)) * attn_scale
        wk = wf((HIDDEN, HIDDEN))
        wv = wf((HIDDEN, HIDDEN))
        w_qkv = jnp.stack(
            [wq.reshape(HIDDEN, NUM_HEADS, HEAD_DIM),
             wk.reshape(HIDDEN, NUM_HEADS, HEAD_DIM),
             wv.reshape(HIDDEN, NUM_HEADS, HEAD_DIM)], axis=2
        ).reshape(HIDDEN, 3 * HIDDEN).astype(ACT_DTYPE)
        # biases are zero here; a real checkpoint's bq would be scaled and the
        # (bq, bk, bv) interleaved into the same head-major layout.
        b_qkv = jnp.zeros((1, 3 * HIDDEN), jnp.float32)

        params["layers"].append(
            {
                "w_qkv": w_qkv,
                "b_qkv": b_qkv,
                "wo": w((HIDDEN, HIDDEN)),
                "bo": jnp.zeros((1, HIDDEN), jnp.float32),
                "ln1_g": jnp.ones((1, HIDDEN), jnp.float32),
                "ln1_b": jnp.zeros((1, HIDDEN), jnp.float32),
                "wi": w((HIDDEN, INTERMEDIATE)),
                "bi": jnp.zeros((1, INTERMEDIATE), jnp.float32),
                "wo2": w((INTERMEDIATE, HIDDEN)),
                "bo2": jnp.zeros((1, HIDDEN), jnp.float32),
                "ln2_g": jnp.ones((1, HIDDEN), jnp.float32),
                "ln2_b": jnp.zeros((1, HIDDEN), jnp.float32),
            }
        )
    return params


# ----------------------------------------------------------------------------
# Forward pass (mirrors CustomProtBERTModel.forward)
# ----------------------------------------------------------------------------
def bert_layer(hidden, lp, mask_bias, return_attentions, probs_dtype):
    B, S, H = hidden.shape
    dh = H // NUM_HEADS
    x2 = hidden.reshape(B * S, H)

    # fused head-major QKV projection -> (B*S, 3H); q is pre-scaled in w_qkv
    qkv = matmul_bias(x2, lp["w_qkv"], lp["b_qkv"])
    qkv = qkv.reshape(B, S, NUM_HEADS, 3 * dh).transpose(0, 2, 1, 3)

    ctx, probs = multi_head_attention(qkv, mask_bias,
                                      return_probs=return_attentions,
                                      probs_dtype=probs_dtype)
    # (B, nH, S, dh) -> (B*S, H) in head-major column order (matches wo rows)
    ctx2 = ctx.transpose(0, 2, 1, 3).reshape(B * S, H)

    # attention output proj fused with residual + LayerNorm
    x_attn = matmul_bias_residual_ln(ctx2, lp["wo"], lp["bo"], x2,
                                     lp["ln1_g"], lp["ln1_b"])

    # FFN: bias+GELU fused into the intermediate matmul,
    # residual+LayerNorm fused into the output matmul
    inter = matmul_bias(x_attn, lp["wi"], lp["bi"], activation="gelu")
    x_out = matmul_bias_residual_ln(inter, lp["wo2"], lp["bo2"], x_attn,
                                    lp["ln2_g"], lp["ln2_b"])

    return x_out.reshape(B, S, H), probs


def custom_protbert_forward(params, input_ids, attention_mask,
                            return_attentions=True,
                            attn_probs_dtype=jnp.bfloat16):
    B, S = input_ids.shape

    # --- embeddings (lookup/add = glue; LayerNorm in Pallas) ---
    emb = (
        jnp.take(params["word_emb"], input_ids, axis=0).astype(jnp.float32)
        + params["pos_emb"][None, :S, :].astype(jnp.float32)
        + params["type_emb"][0][None, None, :].astype(jnp.float32)
    )
    emb2 = emb.reshape(B * S, HIDDEN).astype(ACT_DTYPE)
    hidden = layernorm(emb2, params["emb_ln_g"], params["emb_ln_b"]
                       ).reshape(B, S, HIDDEN)

    # --- extended attention mask: (B, 1, S) additive bias (no head replication)
    mask_bias = ((1.0 - attention_mask.astype(jnp.float32)) * -10000.0)[:, None, :]

    attentions = []
    for lp in params["layers"]:
        hidden, probs = bert_layer(hidden, lp, mask_bias, return_attentions,
                                   attn_probs_dtype)
        if return_attentions:
            attentions.append(probs)

    # --- mean pool over seq (unmasked, as torch.mean in the reference),
    #     dropout(identity), final proj, softmax(dim=1) ---
    softmax_logits, pooled = pool_and_project(
        hidden, params["final_w_pad"], params["final_b_pad"])

    atts = tuple(attentions) if return_attentions else None
    return softmax_logits, pooled, atts


# ----------------------------------------------------------------------------
if __name__ == "__main__":
    key = jax.random.PRNGKey(0)
    k_param, k_ids = jax.random.split(key)

    params = init_params(k_param)
    input_ids = jax.random.randint(k_ids, (BATCH, SEQ), 0, VOCAB, dtype=jnp.int32)
    attention_mask = jnp.ones((BATCH, SEQ), dtype=jnp.int32)
    attention_mask = attention_mask.at[1, 6:].set(0)  # ragged second sequence

    softmax_logits, pooled_emb, attentions = custom_protbert_forward(
        params, input_ids, attention_mask, return_attentions=True
    )
    jax.block_until_ready((softmax_logits, pooled_emb, attentions))

    assert softmax_logits.shape == (BATCH, NUM_LABELS)
    assert pooled_emb.shape == (BATCH, HIDDEN)
    assert len(attentions) == NUM_LAYERS
    assert attentions[0].shape == (BATCH, NUM_HEADS, SEQ, SEQ)
    assert bool(jnp.all(jnp.isfinite(softmax_logits)))

    print("KERNEL_OK")
</pallas_src>

<mosaic_0001>
module attributes {stable_mosaic.version = 11 : i64} {
  func.func @_ln_kernel(%arg0: i32, %arg1: memref<16x32xbf16, #tpu.memory_space<vmem>>, %arg2: memref<1x32xf32, #tpu.memory_space<vmem>>, %arg3: memref<1x32xf32, #tpu.memory_space<vmem>>, %arg4: memref<16x32xbf16, #tpu.memory_space<vmem>>) attributes {dimension_semantics = [#tpu.dimension_semantics<parallel>], iteration_bounds = array<i64: 1>, scalar_prefetch = 0 : i64, scratch_operands = 0 : i64, tpu.core_type = #tpu.core_type<tc>, window_params = [{transform_indices = @transform_0, window_bounds = array<i64: 16, 32>}, {pipeline_mode = #tpu.pipeline_mode<synchronous>, transform_indices = @transform_1, window_bounds = array<i64: 1, 32>}, {pipeline_mode = #tpu.pipeline_mode<synchronous>, transform_indices = @transform_2, window_bounds = array<i64: 1, 32>}, {transform_indices = @transform_3, window_bounds = array<i64: 16, 32>}]} {
    %c0 = arith.constant 0 : index
    %c0_0 = arith.constant 0 : index
    %0 = vector.load %arg1[%c0, %c0_0] : memref<16x32xbf16, #tpu.memory_space<vmem>>, vector<16x32xbf16>
    %1 = arith.extf %0 : vector<16x32xbf16> to vector<16x32xf32>
    %cst = arith.constant dense<0.000000e+00> : vector<16xf32>
    %2 = vector.multi_reduction <add>, %1, %cst [1] : vector<16x32xf32> to vector<16xf32>
    %3 = vector.shape_cast %2 : vector<16xf32> to vector<16x1xf32>
    %cst_1 = arith.constant 3.200000e+01 : f32
    %4 = vector.broadcast %cst_1 : f32 to vector<16x1xf32>
    %5 = arith.divf %3, %4 : vector<16x1xf32>
    %6 = vector.broadcast %5 : vector<16x1xf32> to vector<16x32xf32>
    %7 = arith.subf %1, %6 : vector<16x32xf32>
    %8 = arith.mulf %7, %7 : vector<16x32xf32>
    %cst_2 = arith.constant dense<0.000000e+00> : vector<16xf32>
    %9 = vector.multi_reduction <add>, %8, %cst_2 [1] : vector<16x32xf32> to vector<16xf32>
    %10 = vector.shape_cast %9 : vector<16xf32> to vector<16x1xf32>
    %cst_3 = arith.constant 3.200000e+01 : f32
    %11 = vector.broadcast %cst_3 : f32 to vector<16x1xf32>
    %12 = arith.divf %10, %11 : vector<16x1xf32>
    %13 = vector.broadcast %5 : vector<16x1xf32> to vector<16x32xf32>
    %14 = arith.subf %1, %13 : vector<16x32xf32>
    %cst_4 = arith.constant 9.99999996E-13 : f32
    %15 = vector.broadcast %cst_4 : f32 to vector<16x1xf32>
    %16 = arith.addf %12, %15 : vector<16x1xf32>
    %17 = math.rsqrt %16 : vector<16x1xf32>
    %18 = vector.broadcast %17 : vector<16x1xf32> to vector<16x32xf32>
    %19 = arith.mulf %14, %18 : vector<16x32xf32>
    %c0_5 = arith.constant 0 : index
    %c0_6 = arith.constant 0 : index
    %20 = vector.load %arg2[%c0_5, %c0_6] : memref<1x32xf32, #tpu.memory_space<vmem>>, vector<1x32xf32>
    %21 = vector.broadcast %20 : vector<1x32xf32> to vector<16x32xf32>
    %22 = arith.mulf %19, %21 : vector<16x32xf32>
    %c0_7 = arith.constant 0 : index
    %c0_8 = arith.constant 0 : index
    %23 = vector.load %arg3[%c0_7, %c0_8] : memref<1x32xf32, #tpu.memory_space<vmem>>, vector<1x32xf32>
    %24 = vector.broadcast %23 : vector<1x32xf32> to vector<16x32xf32>
    %25 = arith.addf %22, %24 : vector<16x32xf32>
    %26 = arith.truncf %25 : vector<16x32xf32> to vector<16x32xbf16>
    %c0_9 = arith.constant 0 : index
    %c0_10 = arith.constant 0 : index
    %27 = vector.load %arg4[%c0_9, %c0_10] : memref<16x32xbf16, #tpu.memory_space<vmem>>, vector<16x32xbf16>
    tpu.vector_store %arg4[%c0_9, %c0_10], %26 {strides = array<i32>} : memref<16x32xbf16, #tpu.memory_space<vmem>>, vector<16x32xbf16>,
    return
  }
  func.func @transform_0(%arg0: i32) -> (i32, i32) {
    %c0_i32 = arith.constant 0 : i32
    %c0_i32_0 = arith.constant 0 : i32
    return %arg0, %c0_i32 : i32, i32
  }
  func.func @transform_1(%arg0: i32) -> (i32, i32) {
    %c0_i32 = arith.constant 0 : i32
    %c0_i32_0 = arith.constant 0 : i32
    %c0_i32_1 = arith.constant 0 : i32
    return %c0_i32, %c0_i32_0 : i32, i32
  }
  func.func @transform_2(%arg0: i32) -> (i32, i32) {
    %c0_i32 = arith.constant 0 : i32
    %c0_i32_0 = arith.constant 0 : i32
    %c0_i32_1 = arith.constant 0 : i32
    return %c0_i32, %c0_i32_0 : i32, i32
  }
  func.func @transform_3(%arg0: i32) -> (i32, i32) {
    %c0_i32 = arith.constant 0 : i32
    %c0_i32_0 = arith.constant 0 : i32
    return %arg0, %c0_i32 : i32, i32
  }
}

</mosaic_0001>

<llo_original>
// kernel: tpu_custom_call.1
$region0: #{tpu_custom_call.1}
  #allocation0 [shape = 'u32[]', space=smem, size = 0x4, offset = 0x4, fixed_abs, tag = 'smem constant byte address 0x4 - core index']
  #allocation1 [shape = 'u32[144,128]{1,0:T(1,128)}', space=vmem, size = 0x12000, scoped, tag = 'internal scratch']
  %s0 = inlined_call_operand.hbm [shape: bf16[16,32], index: 0, kind: input, shape index: {}]
  %s1 = inlined_call_operand.vmem [shape: f32[1,32], index: 1, kind: input, shape index: {}]
  %s2 = inlined_call_operand.vmem [shape: f32[1,32], index: 2, kind: input, shape index: {}]
  %s3 = inlined_call_operand.hbm [shape: bf16[16,32], index: 3, kind: output, shape index: {}]
  %s4 = sld [smem:[#allocation0]]
  $region26: #{tpu_custom_call.1} parent=0
    _
  %s6 = ssub.s32 1, %s4
  %s7 = scalar_select 0, %s6, %s4
  $region1: #{tpu_custom_call.1} parent=0
    #allocation2 [shape = 'u8[4096]{0}', space=vmem, size = 0x1000, scoped, tag = 'input window, operand 0, single buffered']
    #allocation3 [shape = 's32[1]{0}', space=sflag, size = 0x4, scoped, tag = 'scoped memory for tpu_custom_call.1']
    #allocation4 [shape = 's32[1]{0}', space=sflag, size = 0x4, scoped, tag = 'scoped memory for tpu_custom_call.1']
    #allocation5 [shape = 'u8[4096]{0}', space=vmem, size = 0x1000, scoped, tag = 'output window, operand 0, single buffered']
    %8 = vsyncpa [#allocation3], 0
    %9 = vsyncpa [#allocation4], 0
    // Predicated region
    $region2: #{tpu_custom_call.1} parent=1 // pred_check
      _
    $region3: #{tpu_custom_call.1} parent=1 // pred_check_branch
      %11 = sbr.rel (0) target = $region5
    $region4: #{tpu_custom_call.1} parent=1 // pred_region
      %s13 = ssub.s32 128, 128
      %14 = vsyncadd [#allocation3], %s13
      %s15 = sshll.u32 [#allocation2], 4
      %s16 = int_to_ptr.vmem [resolvable:$true] %s15
      %21 = dma.hbm_to_vmem [thread:$0]  %s0, 128, %s16, [#allocation3], 64, 64, 4
    $region5: #{tpu_custom_call.1} parent=1 // pred_fallthru
      _
    // Predicated region
    $region6: #{tpu_custom_call.1} parent=1 // pred_check
      _
    $region7: #{tpu_custom_call.1} parent=1 // pred_check_branch
      %23 = sbr.rel (0) target = $region9
    $region8: #{tpu_custom_call.1} parent=1 // pred_region
      _
    $region9: #{tpu_custom_call.1} parent=1 // pred_fallthru
      _
    // Predicated region
    $region10: #{tpu_custom_call.1} parent=1 // pred_check
      _
    $region11: #{tpu_custom_call.1} parent=1 // pred_check_branch
      %25 = sbr.rel (0) target = $region13
    $region12: #{tpu_custom_call.1} parent=1 // pred_region
      _
    $region13: #{tpu_custom_call.1} parent=1 // pred_fallthru
      _
    // Predicated region
    $region14: #{tpu_custom_call.1} parent=1 // pred_check
      _
    $region15: #{tpu_custom_call.1} parent=1 // pred_check_branch
      %27 = sbr.rel (0) target = $region17
    $region16: #{tpu_custom_call.1} parent=1 // pred_region
      %28 = dma.done [#allocation3], 128
    $region17: #{tpu_custom_call.1} parent=1 // pred_fallthru
      _
    %v29 = vld [vmem:[#allocation2] sm:$0xf]
    %v30 = vld [vmem:[#allocation2 + $0x4] sm:$0xf]
    %v31 = vunpack.c.l.bf16 %v29
    %v32 = vunpack.c.l.bf16 %v30
    %vm33 = vcmask 261120
    %v34 = vsel %vm33, %v31, 0.0
    %35 = vadd.xlane.f32.xlu0 %v34
    %v36 = vpop.xlane.xlu0 %35
    %v37 = vsel %vm33, %v32, 0.0
    %38 = vadd.xlane.f32.xlu0 %v37
    %v39 = vpop.xlane.xlu0 %38
    %v40 = vrcp.pop 32.0
    %v41 = vmul.f32 %v36, %v40
    %v42 = vmul.f32 %v39, %v40
    %v43 = vsub.f32 %v31, %v41
    %v44 = vsub.f32 %v32, %v42
    %v45 = vmul.f32 %v43, %v43
    %v46 = vmul.f32 %v44, %v44
    %v47 = vsel %vm33, %v45, 0.0
    %48 = vadd.xlane.f32.xlu0 %v47
    %v49 = vpop.xlane.xlu0 %48
    %v50 = vsel %vm33, %v46, 0.0
    %51 = vadd.xlane.f32.xlu0 %v50
    %v52 = vpop.xlane.xlu0 %51
    %v53 = vmul.f32 %v49, %v40
    %v54 = vmul.f32 %v52, %v40
    %v55 = vadd.f32 %v53, 1e-12
    %v56 = vadd.f32 %v54, 1e-12
    %v57 = vrsqrt.pop %v55
    %v58 = vrsqrt.pop %v56
    %v59 = vmul.f32 %v43, %v57
    %v60 = vmul.f32 %v44, %v58
    %v61 = vld [vmem:[%s1] sm:$0x1]
    %v63 = vlaneseq
    %v64 = vshrl.u32 %v63, 7
    %v65 = vsub.s32 0, %v64
    %v66 = vrot.slane %v61, %v65
    %v68 = vmul.f32 %v59, %v66
    %v69 = vmul.f32 %v60, %v66
    %v70 = vld [vmem:[%s2] sm:$0x1]
    %v72 = vlaneseq
    %v73 = vshrl.u32 %v72, 7
    %v74 = vsub.s32 0, %v73
    %v75 = vrot.slane %v70, %v74
    %v77 = vadd.f32 %v68, %v75
    %v78 = vadd.f32 %v69, %v75
    %v79 = vpack.c.bf16 %v78, %v77
    %v81 = vunpack.c.l.b16 %v79
    %v82 = vunpack.c.h.b16 %v79
    %v83 = vpack.c.b16 %v81, %v81
    %v84 = vpack.c.b16 %v82, %v82
    %vm87 = vcmask 257024
    %88 = vst.msk [vmem:[#allocation5] sm:$0xf] %vm87, %v83
    %89 = vst.msk [vmem:[#allocation5 + $0x4] sm:$0xf] %vm87, %v84
    // Predicated region
    $region18: #{tpu_custom_call.1} parent=1 // pred_check
      _
    $region19: #{tpu_custom_call.1} parent=1 // pred_check_branch
      %91 = sbr.rel (0) target = $region21
    $region20: #{tpu_custom_call.1} parent=1 // pred_region
      %s93 = ssub.s32 128, 128
      %94 = vsyncadd [#allocation4], %s93
      %s95 = sshll.u32 [#allocation5], 4
      %s96 = int_to_ptr.vmem [resolvable:$true] %s95
      %101 = dma.vmem_to_hbm [thread:$0]  %s96, 128, %s3, [#allocation4], 64, 64, 4
    $region21: #{tpu_custom_call.1} parent=1 // pred_fallthru
      _
    // Predicated region
    $region22: #{tpu_custom_call.1} parent=1 // pred_check
      _
    $region23: #{tpu_custom_call.1} parent=1 // pred_check_branch
      %103 = sbr.rel (0) target = $region25
    $region24: #{tpu_custom_call.1} parent=1 // pred_region
      %104 = dma.done [#allocation4], 128
    $region25: #{tpu_custom_call.1} parent=1 // pred_fallthru
      _
    %105 = vsyncpa [#allocation3], 1
    %106 = vsyncpa [#allocation4], 1

</llo_original>
